<compile_context>
chip_gen: v7x
topology: tpu7x:2x2x1
jax: 0.10.0
libtpu: 0.0.40
codegen_flags: <defaults>
</compile_context>

<pallas_src>
import jax
import jax.numpy as jnp
from jax import lax
from jax.experimental import pallas as pl
from jax.experimental.pallas import tpu as pltpu


NEG_SLOPE = 0.01  # nn.LeakyReLU() default


# ----------------------------- Pallas kernel ------------------------------- #
def _fused_disc_kernel(x_ref, a1_ref, s1_ref, a2_ref, s2_ref, a3_ref, s3_ref,
                       wf1_ref, bf1_ref, wf2_ref, bf2_ref, o_ref):
    """Whole Discriminator forward for one batch tile, entirely in VMEM."""

    def leaky(v):
        return jnp.where(v > 0, v, NEG_SLOPE * v)

    h = x_ref[...]                                                        # (TB, L*Cin)
    # conv1 + BN + LeakyReLU (conv/BN folded into a1/s1 at init)
    h = leaky(jnp.dot(h, a1_ref[...], preferred_element_type=jnp.float32) + s1_ref[...])
    # conv2 + BN + LeakyReLU
    h = leaky(jnp.dot(h, a2_ref[...], preferred_element_type=jnp.float32) + s2_ref[...])
    # conv3 + BN + LeakyReLU  -> (TB, 128), already the torch view(B, -1) layout
    h = leaky(jnp.dot(h, a3_ref[...], preferred_element_type=jnp.float32) + s3_ref[...])
    # fc1 + ReLU
    h = jnp.maximum(
        jnp.dot(h, wf1_ref[...], preferred_element_type=jnp.float32) + bf1_ref[...], 0.0)
    # fc2 (logits)
    o_ref[...] = jnp.dot(h, wf2_ref[...], preferred_element_type=jnp.float32) + bf2_ref[...]


# ----------------------------- parameter folding --------------------------- #
def _fold_conv_bn(w, b, gamma, beta, mean, var, L_in, stride=2, pad=1, eps=1e-5):
    """Fold Conv1d(k=3,s=2,p=1) + bias + BatchNorm1d (inference stats) into a
    dense matrix acting on the per-sample (L_in*C_in,) flattened activation."""
    C_out, C_in, K = w.shape
    L_out = (L_in + 2 * pad - K) // stride + 1
    scale = gamma / jnp.sqrt(var + eps)                 # (C_out,)
    shift = (b - mean) * scale + beta                   # (C_out,)
    ws = w * scale[:, None, None]                       # BN scale folded into conv weights
    A = jnp.zeros((L_in * C_in, L_out * C_out), jnp.float32)
    for t in range(L_out):
        for k in range(K):
            l_src = stride * t + k - pad
            if 0 <= l_src < L_in:                       # out-of-range == zero padding
                A = A.at[l_src * C_in:(l_src + 1) * C_in,
                         t * C_out:(t + 1) * C_out].set(ws[:, :, k].T)
    shift_full = jnp.tile(shift, L_out).reshape(1, L_out * C_out)
    return A, shift_full, L_out


def init_params(key, in_channels, num_classes, L):
    ks = jax.random.split(key, 5)
    raw = {}
    chans = [(in_channels, 32), (32, 64), (64, 128)]
    for i, (cin, cout) in enumerate(chans):
        k = jax.random.split(ks[i], 6)
        w = jax.random.normal(k[0], (cout, cin, 3), jnp.float32) / jnp.sqrt(3.0 * cin)
        b = 0.05 * jax.random.normal(k[1], (cout,), jnp.float32)
        gamma = 1.0 + 0.1 * jax.random.normal(k[2], (cout,), jnp.float32)
        beta = 0.1 * jax.random.normal(k[3], (cout,), jnp.float32)
        mean = 0.1 * jax.random.normal(k[4], (cout,), jnp.float32)
        var = 1.0 + 0.2 * jax.random.uniform(k[5], (cout,), jnp.float32)
        raw[f"disc{i + 1}"] = dict(w=w, b=b, gamma=gamma, beta=beta, mean=mean, var=var)
    for i, (fin, fout) in enumerate([(128, 64), (64, num_classes)]):
        k = jax.random.split(ks[3 + i], 2)
        w = jax.random.normal(k[0], (fout, fin), jnp.float32) / jnp.sqrt(fin)
        b = 0.05 * jax.random.normal(k[1], (fout,), jnp.float32)
        raw[f"fc{i + 1}"] = dict(w=w, b=b)

    # Fold everything into the fused-kernel operand set (done once, at init).
    folded = {}
    L_cur = L
    for i in (1, 2, 3):
        blk = raw[f"disc{i}"]
        A, s, L_cur = _fold_conv_bn(blk["w"], blk["b"], blk["gamma"], blk["beta"],
                                    blk["mean"], blk["var"], L_cur)
        folded[f"a{i}"] = A
        folded[f"s{i}"] = s
    assert L_cur * 128 == raw["fc1"]["w"].shape[1], (
        "flatten only matches torch's view(B, -1) when the final conv length is 1")
    folded["wf1"] = raw["fc1"]["w"].T
    folded["bf1"] = raw["fc1"]["b"].reshape(1, -1)
    folded["wf2"] = raw["fc2"]["w"].T
    folded["bf2"] = raw["fc2"]["b"].reshape(1, -1)
    return raw, folded


# ----------------------------- wrapper -------------------------------------- #
def _round_up(n, m):
    return ((n + m - 1) // m) * m


def discriminator_forward(x_ncl, folded):
    """x_ncl: (B, C_in, L) PyTorch layout.  Returns (B, num_classes)."""
    B = x_ncl.shape[0]
    x = jnp.transpose(x_ncl, (0, 2, 1)).astype(jnp.float32)   # (B, L, Cin) channels-last
    x = x.reshape(B, -1)                                      # per-sample flatten: l*Cin + c
    f0 = folded["a1"].shape[0]
    assert x.shape[1] == f0, (x.shape, f0)
    ncls = folded["wf2"].shape[1]

    tile_b = min(256, _round_up(B, 8))
    b_pad = _round_up(B, tile_b)
    if b_pad != B:
        x = jnp.pad(x, ((0, b_pad - B), (0, 0)))

    weights = (folded["a1"], folded["s1"], folded["a2"], folded["s2"],
               folded["a3"], folded["s3"], folded["wf1"], folded["bf1"],
               folded["wf2"], folded["bf2"])

    out = pl.pallas_call(
        _fused_disc_kernel,
        out_shape=jax.ShapeDtypeStruct((b_pad, ncls), jnp.float32),
        grid=(b_pad // tile_b,),
        in_specs=[pl.BlockSpec((tile_b, f0), lambda i: (i, 0))]
                 + [pl.BlockSpec(w.shape, lambda i: (0, 0)) for w in weights],
        out_specs=pl.BlockSpec((tile_b, ncls), lambda i: (i, 0)),
        compiler_params=pltpu.CompilerParams(dimension_semantics=("parallel",)),
    )(x, *weights)
    return out[:B]


# ------------------------ pure-JAX reference (check) ----------------------- #
def ref_forward(x_ncl, raw):
    x = x_ncl.astype(jnp.float32)
    for name in ("disc1", "disc2", "disc3"):
        blk = raw[name]
        x = lax.conv_general_dilated(
            x, blk["w"], window_strides=(2,), padding=((1, 1),),
            dimension_numbers=("NCH", "OIH", "NCH"))
        x = x + blk["b"][None, :, None]
        scale = blk["gamma"] / jnp.sqrt(blk["var"] + 1e-5)
        x = (x - blk["mean"][None, :, None]) * scale[None, :, None] + blk["beta"][None, :, None]
        x = jnp.where(x > 0, x, NEG_SLOPE * x)
    x = x.reshape(x.shape[0], -1)
    x = jnp.maximum(x @ raw["fc1"]["w"].T + raw["fc1"]["b"], 0.0)
    x = x @ raw["fc2"]["w"].T + raw["fc2"]["b"]
    return x


if __name__ == "__main__":
    key = jax.random.PRNGKey(0)
    kx, kp = jax.random.split(key)
    B, C_in, L, num_classes = 2, 4, 8, 10   # L=8 -> 4 -> 2 -> 1, giving 128 flat features
    x = jax.random.normal(kx, (B, C_in, L), jnp.float32)
    raw, folded = init_params(kp, C_in, num_classes, L)

    fwd = jax.jit(discriminator_forward)
    out = jax.block_until_ready(fwd(x, folded))
    ref = jax.block_until_ready(ref_forward(x, raw))

    assert out.shape == (B, num_classes), out.shape
    assert jnp.allclose(out, ref, atol=2e-4, rtol=2e-4), (out, ref)
    print("KERNEL_OK")
</pallas_src>

<mosaic_0001>
module attributes {stable_mosaic.version = 11 : i64} {
  func.func @_fused_disc_kernel(%arg0: i32, %arg1: memref<8x32xf32, #tpu.memory_space<vmem>>, %arg2: memref<32x128xf32, #tpu.memory_space<vmem>>, %arg3: memref<1x128xf32, #tpu.memory_space<vmem>>, %arg4: memref<128x128xf32, #tpu.memory_space<vmem>>, %arg5: memref<1x128xf32, #tpu.memory_space<vmem>>, %arg6: memref<128x128xf32, #tpu.memory_space<vmem>>, %arg7: memref<1x128xf32, #tpu.memory_space<vmem>>, %arg8: memref<128x64xf32, #tpu.memory_space<vmem>>, %arg9: memref<1x64xf32, #tpu.memory_space<vmem>>, %arg10: memref<64x10xf32, #tpu.memory_space<vmem>>, %arg11: memref<1x10xf32, #tpu.memory_space<vmem>>, %arg12: memref<8x10xf32, #tpu.memory_space<vmem>>) attributes {dimension_semantics = [#tpu.dimension_semantics<parallel>], iteration_bounds = array<i64: 1>, scalar_prefetch = 0 : i64, scratch_operands = 0 : i64, tpu.core_type = #tpu.core_type<tc>, window_params = [{transform_indices = @transform_0, window_bounds = array<i64: 8, 32>}, {pipeline_mode = #tpu.pipeline_mode<synchronous>, transform_indices = @transform_1, window_bounds = array<i64: 32, 128>}, {pipeline_mode = #tpu.pipeline_mode<synchronous>, transform_indices = @transform_2, window_bounds = array<i64: 1, 128>}, {pipeline_mode = #tpu.pipeline_mode<synchronous>, transform_indices = @transform_3, window_bounds = array<i64: 128, 128>}, {pipeline_mode = #tpu.pipeline_mode<synchronous>, transform_indices = @transform_4, window_bounds = array<i64: 1, 128>}, {pipeline_mode = #tpu.pipeline_mode<synchronous>, transform_indices = @transform_5, window_bounds = array<i64: 128, 128>}, {pipeline_mode = #tpu.pipeline_mode<synchronous>, transform_indices = @transform_6, window_bounds = array<i64: 1, 128>}, {pipeline_mode = #tpu.pipeline_mode<synchronous>, transform_indices = @transform_7, window_bounds = array<i64: 128, 64>}, {pipeline_mode = #tpu.pipeline_mode<synchronous>, transform_indices = @transform_8, window_bounds = array<i64: 1, 64>}, {pipeline_mode = #tpu.pipeline_mode<synchronous>, transform_indices = @transform_9, window_bounds = array<i64: 64, 10>}, {pipeline_mode = #tpu.pipeline_mode<synchronous>, transform_indices = @transform_10, window_bounds = array<i64: 1, 10>}, {transform_indices = @transform_11, window_bounds = array<i64: 8, 10>}]} {
    %c0 = arith.constant 0 : index
    %c0_0 = arith.constant 0 : index
    %0 = vector.load %arg1[%c0, %c0_0] : memref<8x32xf32, #tpu.memory_space<vmem>>, vector<8x32xf32>
    %c0_1 = arith.constant 0 : index
    %c0_2 = arith.constant 0 : index
    %1 = vector.load %arg2[%c0_1, %c0_2] : memref<32x128xf32, #tpu.memory_space<vmem>>, vector<32x128xf32>
    %cst = arith.constant dense<0.000000e+00> : vector<8x128xf32>
    %2 = tpu.matmul %0, %1, %cst {dimension_numbers = #tpu.dot_dimension_numbers<[1], [0], [0], [1], [0, 0, 1, 1], [], []>} : vector<8x32xf32>, vector<32x128xf32>, vector<8x128xf32> -> vector<8x128xf32>
    %c0_3 = arith.constant 0 : index
    %c0_4 = arith.constant 0 : index
    %3 = vector.load %arg3[%c0_3, %c0_4] : memref<1x128xf32, #tpu.memory_space<vmem>>, vector<1x128xf32>
    %4 = vector.broadcast %3 : vector<1x128xf32> to vector<8x128xf32>
    %5 = arith.addf %2, %4 : vector<8x128xf32>
    %cst_5 = arith.constant 0.000000e+00 : f32
    %6 = vector.broadcast %cst_5 : f32 to vector<8x128xf32>
    %7 = arith.cmpf ogt, %5, %6 : vector<8x128xf32>
    %cst_6 = arith.constant 0.00999999977 : f32
    %8 = vector.broadcast %cst_6 : f32 to vector<8x128xf32>
    %9 = arith.mulf %8, %5 : vector<8x128xf32>
    %10 = arith.select %7, %5, %9 : vector<8x128xi1>, vector<8x128xf32>
    %c0_7 = arith.constant 0 : index
    %c0_8 = arith.constant 0 : index
    %11 = vector.load %arg4[%c0_7, %c0_8] : memref<128x128xf32, #tpu.memory_space<vmem>>, vector<128x128xf32>
    %cst_9 = arith.constant dense<0.000000e+00> : vector<8x128xf32>
    %12 = tpu.matmul %10, %11, %cst_9 {dimension_numbers = #tpu.dot_dimension_numbers<[1], [0], [0], [1], [0, 0, 1, 1], [], []>} : vector<8x128xf32>, vector<128x128xf32>, vector<8x128xf32> -> vector<8x128xf32>
    %c0_10 = arith.constant 0 : index
    %c0_11 = arith.constant 0 : index
    %13 = vector.load %arg5[%c0_10, %c0_11] : memref<1x128xf32, #tpu.memory_space<vmem>>, vector<1x128xf32>
    %14 = vector.broadcast %13 : vector<1x128xf32> to vector<8x128xf32>
    %15 = arith.addf %12, %14 : vector<8x128xf32>
    %cst_12 = arith.constant 0.000000e+00 : f32
    %16 = vector.broadcast %cst_12 : f32 to vector<8x128xf32>
    %17 = arith.cmpf ogt, %15, %16 : vector<8x128xf32>
    %cst_13 = arith.constant 0.00999999977 : f32
    %18 = vector.broadcast %cst_13 : f32 to vector<8x128xf32>
    %19 = arith.mulf %18, %15 : vector<8x128xf32>
    %20 = arith.select %17, %15, %19 : vector<8x128xi1>, vector<8x128xf32>
    %c0_14 = arith.constant 0 : index
    %c0_15 = arith.constant 0 : index
    %21 = vector.load %arg6[%c0_14, %c0_15] : memref<128x128xf32, #tpu.memory_space<vmem>>, vector<128x128xf32>
    %cst_16 = arith.constant dense<0.000000e+00> : vector<8x128xf32>
    %22 = tpu.matmul %20, %21, %cst_16 {dimension_numbers = #tpu.dot_dimension_numbers<[1], [0], [0], [1], [0, 0, 1, 1], [], []>} : vector<8x128xf32>, vector<128x128xf32>, vector<8x128xf32> -> vector<8x128xf32>
    %c0_17 = arith.constant 0 : index
    %c0_18 = arith.constant 0 : index
    %23 = vector.load %arg7[%c0_17, %c0_18] : memref<1x128xf32, #tpu.memory_space<vmem>>, vector<1x128xf32>
    %24 = vector.broadcast %23 : vector<1x128xf32> to vector<8x128xf32>
    %25 = arith.addf %22, %24 : vector<8x128xf32>
    %cst_19 = arith.constant 0.000000e+00 : f32
    %26 = vector.broadcast %cst_19 : f32 to vector<8x128xf32>
    %27 = arith.cmpf ogt, %25, %26 : vector<8x128xf32>
    %cst_20 = arith.constant 0.00999999977 : f32
    %28 = vector.broadcast %cst_20 : f32 to vector<8x128xf32>
    %29 = arith.mulf %28, %25 : vector<8x128xf32>
    %30 = arith.select %27, %25, %29 : vector<8x128xi1>, vector<8x128xf32>
    %c0_21 = arith.constant 0 : index
    %c0_22 = arith.constant 0 : index
    %31 = vector.load %arg8[%c0_21, %c0_22] : memref<128x64xf32, #tpu.memory_space<vmem>>, vector<128x64xf32>
    %cst_23 = arith.constant dense<0.000000e+00> : vector<8x64xf32>
    %32 = tpu.matmul %30, %31, %cst_23 {dimension_numbers = #tpu.dot_dimension_numbers<[1], [0], [0], [1], [0, 0, 1, 1], [], []>} : vector<8x128xf32>, vector<128x64xf32>, vector<8x64xf32> -> vector<8x64xf32>
    %c0_24 = arith.constant 0 : index
    %c0_25 = arith.constant 0 : index
    %33 = vector.load %arg9[%c0_24, %c0_25] : memref<1x64xf32, #tpu.memory_space<vmem>>, vector<1x64xf32>
    %34 = vector.broadcast %33 : vector<1x64xf32> to vector<8x64xf32>
    %35 = arith.addf %32, %34 : vector<8x64xf32>
    %cst_26 = arith.constant 0.000000e+00 : f32
    %36 = vector.broadcast %cst_26 : f32 to vector<8x64xf32>
    %37 = arith.maximumf %35, %36 : vector<8x64xf32>
    %c0_27 = arith.constant 0 : index
    %c0_28 = arith.constant 0 : index
    %38 = vector.load %arg10[%c0_27, %c0_28] : memref<64x10xf32, #tpu.memory_space<vmem>>, vector<64x10xf32>
    %cst_29 = arith.constant dense<0.000000e+00> : vector<8x10xf32>
    %39 = tpu.matmul %37, %38, %cst_29 {dimension_numbers = #tpu.dot_dimension_numbers<[1], [0], [0], [1], [0, 0, 1, 1], [], []>} : vector<8x64xf32>, vector<64x10xf32>, vector<8x10xf32> -> vector<8x10xf32>
    %c0_30 = arith.constant 0 : index
    %c0_31 = arith.constant 0 : index
    %40 = vector.load %arg11[%c0_30, %c0_31] : memref<1x10xf32, #tpu.memory_space<vmem>>, vector<1x10xf32>
    %41 = vector.broadcast %40 : vector<1x10xf32> to vector<8x10xf32>
    %42 = arith.addf %39, %41 : vector<8x10xf32>
    %c0_32 = arith.constant 0 : index
    %c0_33 = arith.constant 0 : index
    %43 = vector.load %arg12[%c0_32, %c0_33] : memref<8x10xf32, #tpu.memory_space<vmem>>, vector<8x10xf32>
    tpu.vector_store %arg12[%c0_32, %c0_33], %42 {strides = array<i32>} : memref<8x10xf32, #tpu.memory_space<vmem>>, vector<8x10xf32>,
    return
  }
  func.func @transform_0(%arg0: i32) -> (i32, i32) {
    %c0_i32 = arith.constant 0 : i32
    %c0_i32_0 = arith.constant 0 : i32
    return %arg0, %c0_i32 : i32, i32
  }
  func.func @transform_1(%arg0: i32) -> (i32, i32) {
    %c0_i32 = arith.constant 0 : i32
    %c0_i32_0 = arith.constant 0 : i32
    %c0_i32_1 = arith.constant 0 : i32
    return %c0_i32, %c0_i32_0 : i32, i32
  }
  func.func @transform_2(%arg0: i32) -> (i32, i32) {
    %c0_i32 = arith.constant 0 : i32
    %c0_i32_0 = arith.constant 0 : i32
    %c0_i32_1 = arith.constant 0 : i32
    return %c0_i32, %c0_i32_0 : i32, i32
  }
  func.func @transform_3(%arg0: i32) -> (i32, i32) {
    %c0_i32 = arith.constant 0 : i32
    %c0_i32_0 = arith.constant 0 : i32
    %c0_i32_1 = arith.constant 0 : i32
    return %c0_i32, %c0_i32_0 : i32, i32
  }
  func.func @transform_4(%arg0: i32) -> (i32, i32) {
    %c0_i32 = arith.constant 0 : i32
    %c0_i32_0 = arith.constant 0 : i32
    %c0_i32_1 = arith.constant 0 : i32
    return %c0_i32, %c0_i32_0 : i32, i32
  }
  func.func @transform_5(%arg0: i32) -> (i32, i32) {
    %c0_i32 = arith.constant 0 : i32
    %c0_i32_0 = arith.constant 0 : i32
    %c0_i32_1 = arith.constant 0 : i32
    return %c0_i32, %c0_i32_0 : i32, i32
  }
  func.func @transform_6(%arg0: i32) -> (i32, i32) {
    %c0_i32 = arith.constant 0 : i32
    %c0_i32_0 = arith.constant 0 : i32
    %c0_i32_1 = arith.constant 0 : i32
    return %c0_i32, %c0_i32_0 : i32, i32
  }
  func.func @transform_7(%arg0: i32) -> (i32, i32) {
    %c0_i32 = arith.constant 0 : i32
    %c0_i32_0 = arith.constant 0 : i32
    %c0_i32_1 = arith.constant 0 : i32
    return %c0_i32, %c0_i32_0 : i32, i32
  }
  func.func @transform_8(%arg0: i32) -> (i32, i32) {
    %c0_i32 = arith.constant 0 : i32
    %c0_i32_0 = arith.constant 0 : i32
    %c0_i32_1 = arith.constant 0 : i32
    return %c0_i32, %c0_i32_0 : i32, i32
  }
  func.func @transform_9(%arg0: i32) -> (i32, i32) {
    %c0_i32 = arith.constant 0 : i32
    %c0_i32_0 = arith.constant 0 : i32
    %c0_i32_1 = arith.constant 0 : i32
    return %c0_i32, %c0_i32_0 : i32, i32
  }
  func.func @transform_10(%arg0: i32) -> (i32, i32) {
    %c0_i32 = arith.constant 0 : i32
    %c0_i32_0 = arith.constant 0 : i32
    %c0_i32_1 = arith.constant 0 : i32
    return %c0_i32, %c0_i32_0 : i32, i32
  }
  func.func @transform_11(%arg0: i32) -> (i32, i32) {
    %c0_i32 = arith.constant 0 : i32
    %c0_i32_0 = arith.constant 0 : i32
    return %arg0, %c0_i32 : i32, i32
  }
}

</mosaic_0001>

<llo_original>
// kernel: discriminator_forward.1
$region0: #{discriminator_forward.1}
  #allocation0 [shape = 'u32[]', space=smem, size = 0x4, offset = 0x4, fixed_abs, tag = 'smem constant byte address 0x4 - core index']
  #allocation1 [shape = 'u32[144,128]{1,0:T(1,128)}', space=vmem, size = 0x12000, scoped, tag = 'internal scratch']
  %s0 = inlined_call_operand.vmem [shape: f32[8,32], index: 0, kind: input, shape index: {}]
  %s1 = inlined_call_operand.hbm [shape: f32[32,128], index: 1, kind: input, shape index: {}]
  %s2 = inlined_call_operand.vmem [shape: f32[1,128], index: 2, kind: input, shape index: {}]
  %s3 = inlined_call_operand.vmem [shape: f32[128,128], index: 3, kind: input, shape index: {}]
  %s4 = inlined_call_operand.vmem [shape: f32[1,128], index: 4, kind: input, shape index: {}]
  %s5 = inlined_call_operand.vmem [shape: f32[128,128], index: 5, kind: input, shape index: {}]
  %s6 = inlined_call_operand.vmem [shape: f32[1,128], index: 6, kind: input, shape index: {}]
  %s7 = inlined_call_operand.vmem [shape: f32[128,64], index: 7, kind: input, shape index: {}]
  %s8 = inlined_call_operand.vmem [shape: f32[1,64], index: 8, kind: input, shape index: {}]
  %s9 = inlined_call_operand.vmem [shape: f32[64,10], index: 9, kind: input, shape index: {}]
  %s10 = inlined_call_operand.vmem [shape: f32[1,10], index: 10, kind: input, shape index: {}]
  %s11 = inlined_call_operand.vmem [shape: f32[8,10], index: 11, kind: output, shape index: {}]
  %s12 = sld [smem:[#allocation0]]
  $region58: #{discriminator_forward.1} parent=0
    _
  %s14 = ssub.s32 1, %s12
  %s15 = scalar_select 0, %s14, %s12
  $region1: #{discriminator_forward.1} parent=0
    #allocation2 [shape = 'u8[16384]{0}', space=vmem, size = 0x4000, scoped, tag = 'input window, operand 1, single buffered']
    #allocation3 [shape = 's32[1]{0}', space=sflag, size = 0x4, scoped, tag = 'scoped memory for discriminator_forward.1']
    %16 = vsyncpa [#allocation3], 0
    // Predicated region
    $region2: #{discriminator_forward.1} parent=1 // pred_check
      _
    $region3: #{discriminator_forward.1} parent=1 // pred_check_branch
      %18 = sbr.rel (0) target = $region5
    $region4: #{discriminator_forward.1} parent=1 // pred_region
      _
    $region5: #{discriminator_forward.1} parent=1 // pred_fallthru
      _
    // Predicated region
    $region6: #{discriminator_forward.1} parent=1 // pred_check
      _
    $region7: #{discriminator_forward.1} parent=1 // pred_check_branch
      %20 = sbr.rel (0) target = $region9
    $region8: #{discriminator_forward.1} parent=1 // pred_region
      %s22 = ssub.s32 512, 512
      %23 = vsyncadd [#allocation3], %s22
      %s24 = sshll.u32 [#allocation2], 4
      %s25 = int_to_ptr.vmem [resolvable:$true] %s24
      %30 = dma.hbm_to_vmem [thread:$0]  %s1, 512, %s25, [#allocation3], 128, 128, 8
    $region9: #{discriminator_forward.1} parent=1 // pred_fallthru
      _
    // Predicated region
    $region10: #{discriminator_forward.1} parent=1 // pred_check
      _
    $region11: #{discriminator_forward.1} parent=1 // pred_check_branch
      %32 = sbr.rel (0) target = $region13
    $region12: #{discriminator_forward.1} parent=1 // pred_region
      _
    $region13: #{discriminator_forward.1} parent=1 // pred_fallthru
      _
    // Predicated region
    $region14: #{discriminator_forward.1} parent=1 // pred_check
      _
    $region15: #{discriminator_forward.1} parent=1 // pred_check_branch
      %34 = sbr.rel (0) target = $region17
    $region16: #{discriminator_forward.1} parent=1 // pred_region
      _
    $region17: #{discriminator_forward.1} parent=1 // pred_fallthru
      _
    // Predicated region
    $region18: #{discriminator_forward.1} parent=1 // pred_check
      _
    $region19: #{discriminator_forward.1} parent=1 // pred_check_branch
      %36 = sbr.rel (0) target = $region21
    $region20: #{discriminator_forward.1} parent=1 // pred_region
      _
    $region21: #{discriminator_forward.1} parent=1 // pred_fallthru
      _
    // Predicated region
    $region22: #{discriminator_forward.1} parent=1 // pred_check
      _
    $region23: #{discriminator_forward.1} parent=1 // pred_check_branch
      %38 = sbr.rel (0) target = $region25
    $region24: #{discriminator_forward.1} parent=1 // pred_region
      _
    $region25: #{discriminator_forward.1} parent=1 // pred_fallthru
      _
    // Predicated region
    $region26: #{discriminator_forward.1} parent=1 // pred_check
      _
    $region27: #{discriminator_forward.1} parent=1 // pred_check_branch
      %40 = sbr.rel (0) target = $region29
    $region28: #{discriminator_forward.1} parent=1 // pred_region
      _
    $region29: #{discriminator_forward.1} parent=1 // pred_fallthru
      _
    // Predicated region
    $region30: #{discriminator_forward.1} parent=1 // pred_check
      _
    $region31: #{discriminator_forward.1} parent=1 // pred_check_branch
      %42 = sbr.rel (0) target = $region33
    $region32: #{discriminator_forward.1} parent=1 // pred_region
      _
    $region33: #{discriminator_forward.1} parent=1 // pred_fallthru
      _
    // Predicated region
    $region34: #{discriminator_forward.1} parent=1 // pred_check
      _
    $region35: #{discriminator_forward.1} parent=1 // pred_check_branch
      %44 = sbr.rel (0) target = $region37
    $region36: #{discriminator_forward.1} parent=1 // pred_region
      _
    $region37: #{discriminator_forward.1} parent=1 // pred_fallthru
      _
    // Predicated region
    $region38: #{discriminator_forward.1} parent=1 // pred_check
      _
    $region39: #{discriminator_forward.1} parent=1 // pred_check_branch
      %46 = sbr.rel (0) target = $region41
    $region40: #{discriminator_forward.1} parent=1 // pred_region
      _
    $region41: #{discriminator_forward.1} parent=1 // pred_fallthru
      _
    // Predicated region
    $region42: #{discriminator_forward.1} parent=1 // pred_check
      _
    $region43: #{discriminator_forward.1} parent=1 // pred_check_branch
      %48 = sbr.rel (0) target = $region45
    $region44: #{discriminator_forward.1} parent=1 // pred_region
      _
    $region45: #{discriminator_forward.1} parent=1 // pred_fallthru
      _
    // Predicated region
    $region46: #{discriminator_forward.1} parent=1 // pred_check
      _
    $region47: #{discriminator_forward.1} parent=1 // pred_check_branch
      %50 = sbr.rel (0) target = $region49
    $region48: #{discriminator_forward.1} parent=1 // pred_region
      %51 = dma.done [#allocation3], 512
    $region49: #{discriminator_forward.1} parent=1 // pred_fallthru
      _
    %v52 = vld [vmem:[%s0] sm:$0xff]
    %v53 = vld [vmem:[#allocation2] sm:$0xff]
    %v54 = vld [vmem:[#allocation2 + $0x8] sm:$0xff]
    %v55 = vld [vmem:[#allocation2 + $0x10] sm:$0xff]
    %v56 = vld [vmem:[#allocation2 + $0x18] sm:$0xff]
    %v57 = vld [vmem:[%s2] sm:$0x1]
    %v59 = vlaneseq
    %v60 = vshrl.u32 %v59, 7
    %v61 = vsub.s32 0, %v60
    %v62 = vrot.slane %v57, %v61
    %vm64 = vcmask 261120
    %v66 = vsel %vm64, %v52, 0
    %68 = vmatprep.subr.mxu0 0.0
    %69 = vmatpush1.msra.mxu0 %v53
    %70 = vmatprep.subr.mxu0 0.0
    %71 = vmatpush1.msra.mxu0 %v54
    %72 = vmatprep.subr.mxu0 0.0
    %73 = vmatpush1.msra.mxu0 %v55
    %74 = vmatprep.subr.mxu0 0.0
    %75 = vmatpush1.msra.mxu0 %v56
    %76 = vmatprep.subr.mxu0 0.0
    %77 = vmatpush1.msra.mxu0 0.0
    %78 = vmatprep.subr.mxu0 0.0
    %79 = vmatpush1.msra.mxu0 0.0
    %80 = vmatprep.subr.mxu0 0.0
    %81 = vmatpush1.msra.mxu0 0.0
    %82 = vmatprep.subr.mxu0 0.0
    %83 = vmatpush1.msra.mxu0 0.0
    %84 = vmatprep.subr.mxu0 0.0
    %85 = vmatpush1.msra.mxu0 0.0
    %86 = vmatprep.subr.mxu0 0.0
    %87 = vmatpush1.msra.mxu0 0.0
    %88 = vmatprep.subr.mxu0 0.0
    %89 = vmatpush1.msra.mxu0 0.0
    %90 = vmatprep.subr.mxu0 0.0
    %91 = vmatpush1.msra.mxu0 0.0
    %92 = vmatprep.subr.mxu0 0.0
    %93 = vmatpush1.msra.mxu0 0.0
    %94 = vmatprep.subr.mxu0 0.0
    %95 = vmatpush1.msra.mxu0 0.0
    %96 = vmatprep.subr.mxu0 0.0
    %97 = vmatpush1.msra.mxu0 0.0
    %98 = vmatprep.subr.mxu0 0.0
    %99 = vmatpush1.msra.mxu0 0.0
    %100 = vmatprep.subr.mxu0 0.0
    %101 = vmatpush1.msra.mxu0 0.0
    %102 = vmatprep.subr.mxu0 0.0
    %103 = vmatpush1.msra.mxu0 0.0
    %104 = vmatprep.subr.mxu0 0.0
    %105 = vmatpush1.msra.mxu0 0.0
    %106 = vmatprep.subr.mxu0 0.0
    %107 = vmatpush1.msra.mxu0 0.0
    %108 = vmatprep.subr.mxu0 0.0
    %109 = vmatpush1.msra.mxu0 0.0
    %110 = vmatprep.subr.mxu0 0.0
    %111 = vmatpush1.msra.mxu0 0.0
    %112 = vmatprep.subr.mxu0 0.0
    %113 = vmatpush1.msra.mxu0 0.0
    %114 = vmatprep.subr.mxu0 0.0
    %115 = vmatpush1.msra.mxu0 0.0
    %116 = vmatprep.subr.mxu0 0.0
    %117 = vmatpush1.msra.mxu0 0.0
    %118 = vmatprep.subr.mxu0 0.0
    %119 = vmatpush1.msra.mxu0 0.0
    %120 = vmatprep.subr.mxu0 0.0
    %121 = vmatpush1.msra.mxu0 0.0
    %122 = vmatprep.subr.mxu0 0.0
    %123 = vmatpush1.msra.mxu0 0.0
    %124 = vmatprep.subr.mxu0 0.0
    %125 = vmatpush1.msra.mxu0 0.0
    %126 = vmatprep.subr.mxu0 0.0
    %127 = vmatpush1.msra.mxu0 0.0
    %128 = vmatprep.subr.mxu0 0.0
    %129 = vmatpush1.msra.mxu0 0.0
    %130 = vmatprep.subr.mxu0 0.0
    %131 = vmatpush1.msra.mxu0 0.0
    %132 = vmatprep.mubr.f32.mxu0 0.0
    %133 = vmatmul.mubr.f32.gmra.mrb[0].mxu0 %v66
    %v134 = vpop.f32.mrb[0].mxu0
    %v135 = vadd.f32 %v62, %v134
    %v136 = vpop.f32.mrb[0].mxu0
    %137 = vdwg.mxu0
    %vm138 = vcmp.gt.f32.partialorder %v135, 0.0
    %v139 = vmul.f32 %v135, 0.01
    %v140 = vsel %vm138, %v135, %v139
    %v141 = vld [vmem:[%s3] sm:$0xff]
    %v142 = vld [vmem:[%s3 + $0x8] sm:$0xff]
    %v143 = vld [vmem:[%s3 + $0x10] sm:$0xff]
    %v144 = vld [vmem:[%s3 + $0x18] sm:$0xff]
    %v145 = vld [vmem:[%s3 + $0x20] sm:$0xff]
    %v146 = vld [vmem:[%s3 + $0x28] sm:$0xff]
    %v147 = vld [vmem:[%s3 + $0x30] sm:$0xff]
    %v148 = vld [vmem:[%s3 + $0x38] sm:$0xff]
    %v149 = vld [vmem:[%s3 + $0x40] sm:$0xff]
    %v150 = vld [vmem:[%s3 + $0x48] sm:$0xff]
    %v151 = vld [vmem:[%s3 + $0x50] sm:$0xff]
    %v152 = vld [vmem:[%s3 + $0x58] sm:$0xff]
    %v153 = vld [vmem:[%s3 + $0x60] sm:$0xff]
    %v154 = vld [vmem:[%s3 + $0x68] sm:$0xff]
    %v155 = vld [vmem:[%s3 + $0x70] sm:$0xff]
    %v156 = vld [vmem:[%s3 + $0x78] sm:$0xff]
    %v157 = vld [vmem:[%s4] sm:$0x1]
    %v159 = vlaneseq
    %v160 = vshrl.u32 %v159, 7
    %v161 = vsub.s32 0, %v160
    %v162 = vrot.slane %v157, %v161
    %164 = vmatprep.subr.mxu0 0.0
    %165 = vmatpush1.msra.mxu0 %v141
    %166 = vmatprep.subr.mxu0 0.0
    %167 = vmatpush1.msra.mxu0 %v142
    %168 = vmatprep.subr.mxu0 0.0
    %169 = vmatpush1.msra.mxu0 %v143
    %170 = vmatprep.subr.mxu0 0.0
    %171 = vmatpush1.msra.mxu0 %v144
    %172 = vmatprep.subr.mxu0 0.0
    %173 = vmatpush1.msra.mxu0 %v145
    %174 = vmatprep.subr.mxu0 0.0
    %175 = vmatpush1.msra.mxu0 %v146
    %176 = vmatprep.subr.mxu0 0.0
    %177 = vmatpush1.msra.mxu0 %v147
    %178 = vmatprep.subr.mxu0 0.0
    %179 = vmatpush1.msra.mxu0 %v148
    %180 = vmatprep.subr.mxu0 0.0
    %181 = vmatpush1.msra.mxu0 %v149
    %182 = vmatprep.subr.mxu0 0.0
    %183 = vmatpush1.msra.mxu0 %v150
    %184 = vmatprep.subr.mxu0 0.0
    %185 = vmatpush1.msra.mxu0 %v151
    %186 = vmatprep.subr.mxu0 0.0
    %187 = vmatpush1.msra.mxu0 %v152
    %188 = vmatprep.subr.mxu0 0.0
    %189 = vmatpush1.msra.mxu0 %v153
    %190 = vmatprep.subr.mxu0 0.0
    %191 = vmatpush1.msra.mxu0 %v154
    %192 = vmatprep.subr.mxu0 0.0
    %193 = vmatpush1.msra.mxu0 %v155
    %194 = vmatprep.subr.mxu0 0.0
    %195 = vmatpush1.msra.mxu0 %v156
    %196 = vmatprep.subr.mxu0 0.0
    %197 = vmatpush1.msra.mxu0 0.0
    %198 = vmatprep.subr.mxu0 0.0
    %199 = vmatpush1.msra.mxu0 0.0
    %200 = vmatprep.subr.mxu0 0.0
    %201 = vmatpush1.msra.mxu0 0.0
    %202 = vmatprep.subr.mxu0 0.0
    %203 = vmatpush1.msra.mxu0 0.0
    %204 = vmatprep.subr.mxu0 0.0
    %205 = vmatpush1.msra.mxu0 0.0
    %206 = vmatprep.subr.mxu0 0.0
    %207 = vmatpush1.msra.mxu0 0.0
    %208 = vmatprep.subr.mxu0 0.0
    %209 = vmatpush1.msra.mxu0 0.0
    %210 = vmatprep.subr.mxu0 0.0
    %211 = vmatpush1.msra.mxu0 0.0
    %212 = vmatprep.subr.mxu0 0.0
    %213 = vmatpush1.msra.mxu0 0.0
    %214 = vmatprep.subr.mxu0 0.0
    %215 = vmatpush1.msra.mxu0 0.0
    %216 = vmatprep.subr.mxu0 0.0
    %217 = vmatpush1.msra.mxu0 0.0
    %218 = vmatprep.subr.mxu0 0.0
    %219 = vmatpush1.msra.mxu0 0.0
    %220 = vmatprep.subr.mxu0 0.0
    %221 = vmatpush1.msra.mxu0 0.0
    %222 = vmatprep.subr.mxu0 0.0
    %223 = vmatpush1.msra.mxu0 0.0
    %224 = vmatprep.subr.mxu0 0.0
    %225 = vmatpush1.msra.mxu0 0.0
    %226 = vmatprep.subr.mxu0 0.0
    %227 = vmatpush1.msra.mxu0 0.0
    %228 = vmatprep.mubr.f32.mxu0 0.0
    %229 = vmatmul.mubr.f32.gmra.mrb[0].mxu0 %v140
    %v230 = vpop.f32.mrb[0].mxu0
    %v231 = vadd.f32 %v162, %v230
    %v232 = vpop.f32.mrb[0].mxu0
    %233 = vdwg.mxu0
    %vm234 = vcmp.gt.f32.partialorder %v231, 0.0
    %v235 = vmul.f32 %v231, 0.01
    %v236 = vsel %vm234, %v231, %v235
    %v237 = vld [vmem:[%s5] sm:$0xff]
    %v238 = vld [vmem:[%s5 + $0x8] sm:$0xff]
    %v239 = vld [vmem:[%s5 + $0x10] sm:$0xff]
    %v240 = vld [vmem:[%s5 + $0x18] sm:$0xff]
    %v241 = vld [vmem:[%s5 + $0x20] sm:$0xff]
    %v242 = vld [vmem:[%s5 + $0x28] sm:$0xff]
    %v243 = vld [vmem:[%s5 + $0x30] sm:$0xff]
    %v244 = vld [vmem:[%s5 + $0x38] sm:$0xff]
    %v245 = vld [vmem:[%s5 + $0x40] sm:$0xff]
    %v246 = vld [vmem:[%s5 + $0x48] sm:$0xff]
    %v247 = vld [vmem:[%s5 + $0x50] sm:$0xff]
    %v248 = vld [vmem:[%s5 + $0x58] sm:$0xff]
    %v249 = vld [vmem:[%s5 + $0x60] sm:$0xff]
    %v250 = vld [vmem:[%s5 + $0x68] sm:$0xff]
    %v251 = vld [vmem:[%s5 + $0x70] sm:$0xff]
    %v252 = vld [vmem:[%s5 + $0x78] sm:$0xff]
    %v253 = vld [vmem:[%s6] sm:$0x1]
    %v255 = vlaneseq
    %v256 = vshrl.u32 %v255, 7
    %v257 = vsub.s32 0, %v256
    %v258 = vrot.slane %v253, %v257
    %260 = vmatprep.subr.mxu0 0.0
    %261 = vmatpush1.msra.mxu0 %v237
    %262 = vmatprep.subr.mxu0 0.0
    %263 = vmatpush1.msra.mxu0 %v238
    %264 = vmatprep.subr.mxu0 0.0
    %265 = vmatpush1.msra.mxu0 %v239
    %266 = vmatprep.subr.mxu0 0.0
    %267 = vmatpush1.msra.mxu0 %v240
    %268 = vmatprep.subr.mxu0 0.0
    %269 = vmatpush1.msra.mxu0 %v241
    %270 = vmatprep.subr.mxu0 0.0
    %271 = vmatpush1.msra.mxu0 %v242
    %272 = vmatprep.subr.mxu0 0.0
    %273 = vmatpush1.msra.mxu0 %v243
    %274 = vmatprep.subr.mxu0 0.0
    %275 = vmatpush1.msra.mxu0 %v244
    %276 = vmatprep.subr.mxu0 0.0
    %277 = vmatpush1.msra.mxu0 %v245
    %278 = vmatprep.subr.mxu0 0.0
    %279 = vmatpush1.msra.mxu0 %v246
    %280 = vmatprep.subr.mxu0 0.0
    %281 = vmatpush1.msra.mxu0 %v247
    %282 = vmatprep.subr.mxu0 0.0
    %283 = vmatpush1.msra.mxu0 %v248
    %284 = vmatprep.subr.mxu0 0.0
    %285 = vmatpush1.msra.mxu0 %v249
    %286 = vmatprep.subr.mxu0 0.0
    %287 = vmatpush1.msra.mxu0 %v250
    %288 = vmatprep.subr.mxu0 0.0
    %289 = vmatpush1.msra.mxu0 %v251
    %290 = vmatprep.subr.mxu0 0.0
    %291 = vmatpush1.msra.mxu0 %v252
    %292 = vmatprep.subr.mxu0 0.0
    %293 = vmatpush1.msra.mxu0 0.0
    %294 = vmatprep.subr.mxu0 0.0
    %295 = vmatpush1.msra.mxu0 0.0
    %296 = vmatprep.subr.mxu0 0.0
    %297 = vmatpush1.msra.mxu0 0.0
    %298 = vmatprep.subr.mxu0 0.0
    %299 = vmatpush1.msra.mxu0 0.0
    %300 = vmatprep.subr.mxu0 0.0
    %301 = vmatpush1.msra.mxu0 0.0
    %302 = vmatprep.subr.mxu0 0.0
    %303 = vmatpush1.msra.mxu0 0.0
    %304 = vmatprep.subr.mxu0 0.0
    %305 = vmatpush1.msra.mxu0 0.0
    %306 = vmatprep.subr.mxu0 0.0
    %307 = vmatpush1.msra.mxu0 0.0
    %308 = vmatprep.subr.mxu0 0.0
    %309 = vmatpush1.msra.mxu0 0.0
    %310 = vmatprep.subr.mxu0 0.0
    %311 = vmatpush1.msra.mxu0 0.0
    %312 = vmatprep.subr.mxu0 0.0
    %313 = vmatpush1.msra.mxu0 0.0
    %314 = vmatprep.subr.mxu0 0.0
    %315 = vmatpush1.msra.mxu0 0.0
    %316 = vmatprep.subr.mxu0 0.0
    %317 = vmatpush1.msra.mxu0 0.0
    %318 = vmatprep.subr.mxu0 0.0
    %319 = vmatpush1.msra.mxu0 0.0
    %320 = vmatprep.subr.mxu0 0.0
    %321 = vmatpush1.msra.mxu0 0.0
    %322 = vmatprep.subr.mxu0 0.0
    %323 = vmatpush1.msra.mxu0 0.0
    %324 = vmatprep.mubr.f32.mxu0 0.0
    %325 = vmatmul.mubr.f32.gmra.mrb[0].mxu0 %v236
    %v326 = vpop.f32.mrb[0].mxu0
    %v327 = vadd.f32 %v258, %v326
    %v328 = vpop.f32.mrb[0].mxu0
    %329 = vdwg.mxu0
    %vm330 = vcmp.gt.f32.partialorder %v327, 0.0
    %v331 = vmul.f32 %v327, 0.01
    %v332 = vsel %vm330, %v327, %v331
    %v333 = vld [vmem:[%s7] sm:$0xff]
    %v334 = vld [vmem:[%s7 + $0x8] sm:$0xff]
    %v335 = vld [vmem:[%s7 + $0x10] sm:$0xff]
    %v336 = vld [vmem:[%s7 + $0x18] sm:$0xff]
    %v337 = vld [vmem:[%s7 + $0x20] sm:$0xff]
    %v338 = vld [vmem:[%s7 + $0x28] sm:$0xff]
    %v339 = vld [vmem:[%s7 + $0x30] sm:$0xff]
    %v340 = vld [vmem:[%s7 + $0x38] sm:$0xff]
    %v341 = vld [vmem:[%s7 + $0x40] sm:$0xff]
    %v342 = vld [vmem:[%s7 + $0x48] sm:$0xff]
    %v343 = vld [vmem:[%s7 + $0x50] sm:$0xff]
    %v344 = vld [vmem:[%s7 + $0x58] sm:$0xff]
    %v345 = vld [vmem:[%s7 + $0x60] sm:$0xff]
    %v346 = vld [vmem:[%s7 + $0x68] sm:$0xff]
    %v347 = vld [vmem:[%s7 + $0x70] sm:$0xff]
    %v348 = vld [vmem:[%s7 + $0x78] sm:$0xff]
    %v349 = vld [vmem:[%s8] sm:$0x1]
    %v351 = vlaneseq
    %v352 = vshrl.u32 %v351, 7
    %v353 = vsub.s32 0, %v352
    %v354 = vrot.slane %v349, %v353
    %356 = vmatprep.subr.mxu0 0.0
    %357 = vmatpush1.msra.mxu0 %v333
    %358 = vmatprep.subr.mxu0 0.0
    %359 = vmatpush1.msra.mxu0 %v334
    %360 = vmatprep.subr.mxu0 0.0
    %361 = vmatpush1.msra.mxu0 %v335
    %362 = vmatprep.subr.mxu0 0.0
    %363 = vmatpush1.msra.mxu0 %v336
    %364 = vmatprep.subr.mxu0 0.0
    %365 = vmatpush1.msra.mxu0 %v337
    %366 = vmatprep.subr.mxu0 0.0
    %367 = vmatpush1.msra.mxu0 %v338
    %368 = vmatprep.subr.mxu0 0.0
    %369 = vmatpush1.msra.mxu0 %v339
    %370 = vmatprep.subr.mxu0 0.0
    %371 = vmatpush1.msra.mxu0 %v340
    %372 = vmatprep.subr.mxu0 0.0
    %373 = vmatpush1.msra.mxu0 %v341
    %374 = vmatprep.subr.mxu0 0.0
    %375 = vmatpush1.msra.mxu0 %v342
    %376 = vmatprep.subr.mxu0 0.0
    %377 = vmatpush1.msra.mxu0 %v343
    %378 = vmatprep.subr.mxu0 0.0
    %379 = vmatpush1.msra.mxu0 %v344
    %380 = vmatprep.subr.mxu0 0.0
    %381 = vmatpush1.msra.mxu0 %v345
    %382 = vmatprep.subr.mxu0 0.0
    %383 = vmatpush1.msra.mxu0 %v346
    %384 = vmatprep.subr.mxu0 0.0
    %385 = vmatpush1.msra.mxu0 %v347
    %386 = vmatprep.subr.mxu0 0.0
    %387 = vmatpush1.msra.mxu0 %v348
    %388 = vmatprep.subr.mxu0 0.0
    %389 = vmatpush1.msra.mxu0 0.0
    %390 = vmatprep.subr.mxu0 0.0
    %391 = vmatpush1.msra.mxu0 0.0
    %392 = vmatprep.subr.mxu0 0.0
    %393 = vmatpush1.msra.mxu0 0.0
    %394 = vmatprep.subr.mxu0 0.0
    %395 = vmatpush1.msra.mxu0 0.0
    %396 = vmatprep.subr.mxu0 0.0
    %397 = vmatpush1.msra.mxu0 0.0
    %398 = vmatprep.subr.mxu0 0.0
    %399 = vmatpush1.msra.mxu0 0.0
    %400 = vmatprep.subr.mxu0 0.0
    %401 = vmatpush1.msra.mxu0 0.0
    %402 = vmatprep.subr.mxu0 0.0
    %403 = vmatpush1.msra.mxu0 0.0
    %404 = vmatprep.subr.mxu0 0.0
    %405 = vmatpush1.msra.mxu0 0.0
    %406 = vmatprep.subr.mxu0 0.0
    %407 = vmatpush1.msra.mxu0 0.0
    %408 = vmatprep.subr.mxu0 0.0
    %409 = vmatpush1.msra.mxu0 0.0
    %410 = vmatprep.subr.mxu0 0.0
    %411 = vmatpush1.msra.mxu0 0.0
    %412 = vmatprep.subr.mxu0 0.0
    %413 = vmatpush1.msra.mxu0 0.0
    %414 = vmatprep.subr.mxu0 0.0
    %415 = vmatpush1.msra.mxu0 0.0
    %416 = vmatprep.subr.mxu0 0.0
    %417 = vmatpush1.msra.mxu0 0.0
    %418 = vmatprep.subr.mxu0 0.0
    %419 = vmatpush1.msra.mxu0 0.0
    %420 = vmatprep.mubr.f32.mxu0 0.0
    %421 = vmatmul.mubr.f32.gmra.mrb[0].mxu0 %v332
    %v422 = vpop.f32.mrb[0].mxu0
    %v423 = vadd.f32 %v354, %v422
    %v424 = vpop.f32.mrb[0].mxu0
    %425 = vdwg.mxu0
    %v426 = vmax.f32 %v423, 0.0
    %v427 = vld [vmem:[%s9] sm:$0xff]
    %v428 = vld [vmem:[%s9 + $0x8] sm:$0xff]
    %v429 = vld [vmem:[%s9 + $0x10] sm:$0xff]
    %v430 = vld [vmem:[%s9 + $0x18] sm:$0xff]
    %v431 = vld [vmem:[%s9 + $0x20] sm:$0xff]
    %v432 = vld [vmem:[%s9 + $0x28] sm:$0xff]
    %v433 = vld [vmem:[%s9 + $0x30] sm:$0xff]
    %v434 = vld [vmem:[%s9 + $0x38] sm:$0xff]
    %v435 = vld [vmem:[%s10] sm:$0x1]
    %v437 = vlaneseq
    %v438 = vshrl.u32 %v437, 7
    %v439 = vsub.s32 0, %v438
    %v440 = vrot.slane %v435, %v439
    %vm442 = vcmask 523264
    %v444 = vsel %vm442, %v426, 0
    %446 = vmatprep.subr.mxu0 0.0
    %447 = vmatpush1.msra.mxu0 %v427
    %448 = vmatprep.subr.mxu0 0.0
    %449 = vmatpush1.msra.mxu0 %v428
    %450 = vmatprep.subr.mxu0 0.0
    %451 = vmatpush1.msra.mxu0 %v429
    %452 = vmatprep.subr.mxu0 0.0
    %453 = vmatpush1.msra.mxu0 %v430
    %454 = vmatprep.subr.mxu0 0.0
    %455 = vmatpush1.msra.mxu0 %v431
    %456 = vmatprep.subr.mxu0 0.0
    %457 = vmatpush1.msra.mxu0 %v432
    %458 = vmatprep.subr.mxu0 0.0
    %459 = vmatpush1.msra.mxu0 %v433
    %460 = vmatprep.subr.mxu0 0.0
    %461 = vmatpush1.msra.mxu0 %v434
    %462 = vmatprep.subr.mxu0 0.0
    %463 = vmatpush1.msra.mxu0 0.0
    %464 = vmatprep.subr.mxu0 0.0
    %465 = vmatpush1.msra.mxu0 0.0
    %466 = vmatprep.subr.mxu0 0.0
    %467 = vmatpush1.msra.mxu0 0.0
    %468 = vmatprep.subr.mxu0 0.0
    %469 = vmatpush1.msra.mxu0 0.0
    %470 = vmatprep.subr.mxu0 0.0
    %471 = vmatpush1.msra.mxu0 0.0
    %472 = vmatprep.subr.mxu0 0.0
    %473 = vmatpush1.msra.mxu0 0.0
    %474 = vmatprep.subr.mxu0 0.0
    %475 = vmatpush1.msra.mxu0 0.0
    %476 = vmatprep.subr.mxu0 0.0
    %477 = vmatpush1.msra.mxu0 0.0
    %478 = vmatprep.subr.mxu0 0.0
    %479 = vmatpush1.msra.mxu0 0.0
    %480 = vmatprep.subr.mxu0 0.0
    %481 = vmatpush1.msra.mxu0 0.0
    %482 = vmatprep.subr.mxu0 0.0
    %483 = vmatpush1.msra.mxu0 0.0
    %484 = vmatprep.subr.mxu0 0.0
    %485 = vmatpush1.msra.mxu0 0.0
    %486 = vmatprep.subr.mxu0 0.0
    %487 = vmatpush1.msra.mxu0 0.0
    %488 = vmatprep.subr.mxu0 0.0
    %489 = vmatpush1.msra.mxu0 0.0
    %490 = vmatprep.subr.mxu0 0.0
    %491 = vmatpush1.msra.mxu0 0.0
    %492 = vmatprep.subr.mxu0 0.0
    %493 = vmatpush1.msra.mxu0 0.0
    %494 = vmatprep.subr.mxu0 0.0
    %495 = vmatpush1.msra.mxu0 0.0
    %496 = vmatprep.subr.mxu0 0.0
    %497 = vmatpush1.msra.mxu0 0.0
    %498 = vmatprep.subr.mxu0 0.0
    %499 = vmatpush1.msra.mxu0 0.0
    %500 = vmatprep.subr.mxu0 0.0
    %501 = vmatpush1.msra.mxu0 0.0
    %502 = vmatprep.subr.mxu0 0.0
    %503 = vmatpush1.msra.mxu0 0.0
    %504 = vmatprep.subr.mxu0 0.0
    %505 = vmatpush1.msra.mxu0 0.0
    %506 = vmatprep.subr.mxu0 0.0
    %507 = vmatpush1.msra.mxu0 0.0
    %508 = vmatprep.subr.mxu0 0.0
    %509 = vmatpush1.msra.mxu0 0.0
    %510 = vmatprep.mubr.f32.mxu0 0.0
    %511 = vmatmul.mubr.f32.gmra.mrb[0].mxu0 %v444
    %v512 = vpop.f32.mrb[0].mxu0
    %v513 = vadd.f32 %v440, %v512
    %v514 = vpop.f32.mrb[0].mxu0
    %515 = vdwg.mxu0
    %vm516 = vcmask 80896
    %517 = vst.msk [vmem:[%s11] sm:$0xff] %vm516, %v513
    // Predicated region
    $region50: #{discriminator_forward.1} parent=1 // pred_check
      _
    $region51: #{discriminator_forward.1} parent=1 // pred_check_branch
      %519 = sbr.rel (0) target = $region53
    $region52: #{discriminator_forward.1} parent=1 // pred_region
      _
    $region53: #{discriminator_forward.1} parent=1 // pred_fallthru
      _
    // Predicated region
    $region54: #{discriminator_forward.1} parent=1 // pred_check
      _
    $region55: #{discriminator_forward.1} parent=1 // pred_check_branch
      %521 = sbr.rel (0) target = $region57
    $region56: #{discriminator_forward.1} parent=1 // pred_region
      _
    $region57: #{discriminator_forward.1} parent=1 // pred_fallthru
      _
    %522 = vsyncpa [#allocation3], 1

</llo_original>
